<compile_context>
chip_gen: v6e
topology: v6e:2x2x1
jax: 0.10.0
libtpu: 0.0.40
codegen_flags: <defaults>
</compile_context>

<pallas_src>
import jax
import jax.numpy as jnp
from jax.experimental import pallas as pl
from jax.experimental.pallas import tpu as pltpu


def _soil_bucket_kernel(
    x_ref, h1_ref, h2_ref, e_ref, sel_ref,
    wk1_ref, wk2_ref, we1_ref, we2_ref, wl_ref,
    q1_ref, q2_ref, h1o_ref, h2o_ref,
):
    """One (TBR, fold*nh) lane-dense tile of the SoilBucket update."""
    sig = jax.nn.sigmoid

    x = x_ref[...]            # [TBR, W]
    h1 = h1_ref[...]          # [TBR, W]
    h2 = h2_ref[...]          # [TBR, W]

    # Per-hidden-unit parameter transforms ([1, W] vregs; EUP work, negligible,
    # params are VMEM-resident across grid steps).
    s_wk1 = sig(wk1_ref[...])
    s_wk2 = sig(wk2_ref[...])          # computed once; q3 == q2 reuses it
    s_we1 = sig(we1_ref[...])
    s_we2 = sig(we2_ref[...])
    L = jnp.exp(wl_ref[...])

    # Lane-broadcast of the per-batch E over its nh lanes inside each folded
    # group: E_b[r, j] = E_fold[r, j // nh].  Done with fold (<= 4) VPU
    # multiply-adds against the resident 0/1 selector (exact: one nonzero term).
    e = e_ref[...]                     # [TBR, fold]
    sel = sel_ref[...]                 # [fold, W]
    E_b = e[:, 0:1] * sel[0:1, :]      # [TBR,1] x [1,W] broadcasts
    for f in range(1, sel.shape[0]):   # static, unrolled at trace time
        E_b = E_b + e[:, f:f + 1] * sel[f:f + 1, :]

    e1 = E_b * s_we1
    e2 = E_b * s_we2

    t = h2 + x                                   # CSE: used twice below
    h1_new = jnp.maximum(h1 + t - L, 0.0)        # relu
    q1 = h1_new * s_wk1
    h2_new = jnp.minimum(h1_new + t, L)          # uses the *new* h1 (as in PyTorch)
    q2 = h2_new * s_wk2                          # q3 is bit-identical to q2

    q1_ref[...] = q1
    q2_ref[...] = q2
    h1o_ref[...] = jnp.maximum(h1_new - q1 - e1, 0.0)
    # reference order: h2 - q2 - e2 - q3, with q3 == q2
    h2o_ref[...] = jnp.maximum(h2_new - q2 - e2 - q2, 0.0)


def soil_bucket_forward(x, h1, h2, E, params, *, max_block_rows=1024):
    """SoilBucket.forward.  x, h1, h2: [B, nh]; E: [B]; params: dict of [nh] vectors.

    Returns (q1, q2, q3, h1_new, h2_new); q3 is aliased to q2 (identical values
    in the reference module), so only 4 output arrays hit HBM.
    """
    B, nh = x.shape
    dtype = x.dtype

    # Fold groups of (128 // nh) batch rows into the lane dim so stores are
    # lane-dense; falls back to fold=1 if nh does not divide 128.
    fold = 128 // nh if (nh < 128 and 128 % nh == 0) else 1
    W = fold * nh

    rows = pl.cdiv(B, fold)
    if rows <= max_block_rows:
        tbr = pl.cdiv(rows, 8) * 8               # sublane-aligned single block
    else:
        tbr = max_block_rows                     # multiple of 8
    rows_pad = pl.cdiv(rows, tbr) * tbr
    b_pad = rows_pad * fold

    def fold_state(a):                           # [B, nh] -> [rows_pad, W]
        if b_pad != B:
            a = jnp.pad(a, ((0, b_pad - B), (0, 0)))
        return a.reshape(rows_pad, W)

    xf, h1f, h2f = fold_state(x), fold_state(h1), fold_state(h2)

    Ef = E.astype(dtype)
    if b_pad != B:
        Ef = jnp.pad(Ef, (0, b_pad - B))
    Ef = Ef.reshape(rows_pad, fold)              # stays narrow; broadcast in-kernel

    def fold_param(p):                           # [nh] -> [1, W], tiled over the fold
        return jnp.tile(p.reshape(1, nh).astype(dtype), (1, fold))

    wk1, wk2 = fold_param(params["wk1"]), fold_param(params["wk2"])
    we1, we2 = fold_param(params["we1"]), fold_param(params["we2"])
    wl = fold_param(params["wl"])
    # wk3 exists in the module but is unused in forward (kept in params for parity).

    # 0/1 selector: sel[f, j] = 1 iff lane j belongs to folded batch slot f.
    sel = jnp.repeat(jnp.eye(fold, dtype=dtype), nh, axis=1)   # [fold, W]

    grid = (rows_pad // tbr,)
    state_spec = pl.BlockSpec((tbr, W), lambda i: (i, 0))
    e_spec = pl.BlockSpec((tbr, fold), lambda i: (i, 0))
    param_spec = pl.BlockSpec((1, W), lambda i: (0, 0))        # VMEM-resident
    sel_spec = pl.BlockSpec((fold, W), lambda i: (0, 0))       # VMEM-resident

    out_sd = jax.ShapeDtypeStruct((rows_pad, W), dtype)

    q1f, q2f, h1of, h2of = pl.pallas_call(
        _soil_bucket_kernel,
        grid=grid,
        in_specs=[state_spec, state_spec, state_spec, e_spec, sel_spec,
                  param_spec, param_spec, param_spec, param_spec, param_spec],
        out_specs=(state_spec, state_spec, state_spec, state_spec),
        out_shape=(out_sd, out_sd, out_sd, out_sd),
        compiler_params=pltpu.CompilerParams(
            dimension_semantics=("parallel",)),   # shard batch grid over v7x's 2 TCs
    )(xf, h1f, h2f, Ef, sel, wk1, wk2, we1, we2, wl)

    def unfold(a):                               # [rows_pad, W] -> [B, nh]
        return a.reshape(b_pad, nh)[:B]

    q1, q2, h1o, h2o = unfold(q1f), unfold(q2f), unfold(h1of), unfold(h2of)
    return q1, q2, q2, h1o, h2o                  # q3 aliased to q2 (identical values)


def _reference(x, h1, h2, E, params):
    sig = jax.nn.sigmoid
    e1 = E[:, None] * sig(params["we1"])
    e2 = E[:, None] * sig(params["we2"])
    L = jnp.exp(params["wl"])
    h1 = jnp.maximum(h1 + h2 + x - L, 0.0)
    q1 = h1 * sig(params["wk1"])
    h2 = jnp.minimum(h1 + h2 + x, L)
    q2 = h2 * sig(params["wk2"])
    q3 = h2 * sig(params["wk2"])
    h1 = jnp.maximum(h1 - q1 - e1, 0.0)
    h2 = jnp.maximum(h2 - q2 - e2 - q3, 0.0)
    return q1, q2, q3, h1, h2


if __name__ == "__main__":
    B, nh = 2, 32
    key = jax.random.PRNGKey(0)
    k = jax.random.split(key, 10)

    # Parameters: uniform(-1, 1), matching reset_parameters() (deterministic seed).
    params = {
        "wk1": jax.random.uniform(k[0], (nh,), minval=-1.0, maxval=1.0),
        "wk2": jax.random.uniform(k[1], (nh,), minval=-1.0, maxval=1.0),
        "wk3": jax.random.uniform(k[2], (nh,), minval=-1.0, maxval=1.0),  # unused in forward
        "we1": jax.random.uniform(k[3], (nh,), minval=-1.0, maxval=1.0),
        "we2": jax.random.uniform(k[4], (nh,), minval=-1.0, maxval=1.0),
        "wl":  jax.random.uniform(k[5], (nh,), minval=-1.0, maxval=1.0),
    }

    x = jax.random.uniform(k[6], (B, nh), minval=0.0, maxval=2.0)
    h1 = jax.random.uniform(k[7], (B, nh), minval=0.0, maxval=1.0)
    h2 = jax.random.uniform(k[8], (B, nh), minval=0.0, maxval=1.0)
    E = jax.random.uniform(k[9], (B,), minval=0.0, maxval=0.5)

    outs = jax.block_until_ready(soil_bucket_forward(x, h1, h2, E, params))

    refs = _reference(x, h1, h2, E, params)
    for o, r in zip(outs, refs):
        assert o.shape == r.shape and o.dtype == r.dtype
        assert jnp.allclose(o, r, atol=1e-5, rtol=1e-5)

    print("KERNEL_OK")
</pallas_src>

<mosaic_0001>
module attributes {stable_mosaic.version = 11 : i64} {
  func.func @_soil_bucket_kernel(%arg0: i32, %arg1: memref<8x128xf32, #tpu.memory_space<vmem>>, %arg2: memref<8x128xf32, #tpu.memory_space<vmem>>, %arg3: memref<8x128xf32, #tpu.memory_space<vmem>>, %arg4: memref<8x4xf32, #tpu.memory_space<vmem>>, %arg5: memref<4x128xf32, #tpu.memory_space<vmem>>, %arg6: memref<1x128xf32, #tpu.memory_space<vmem>>, %arg7: memref<1x128xf32, #tpu.memory_space<vmem>>, %arg8: memref<1x128xf32, #tpu.memory_space<vmem>>, %arg9: memref<1x128xf32, #tpu.memory_space<vmem>>, %arg10: memref<1x128xf32, #tpu.memory_space<vmem>>, %arg11: memref<8x128xf32, #tpu.memory_space<vmem>>, %arg12: memref<8x128xf32, #tpu.memory_space<vmem>>, %arg13: memref<8x128xf32, #tpu.memory_space<vmem>>, %arg14: memref<8x128xf32, #tpu.memory_space<vmem>>) attributes {dimension_semantics = [#tpu.dimension_semantics<parallel>], iteration_bounds = array<i64: 1>, scalar_prefetch = 0 : i64, scratch_operands = 0 : i64, tpu.core_type = #tpu.core_type<tc>, window_params = [{transform_indices = @transform_0, window_bounds = array<i64: 8, 128>}, {transform_indices = @transform_1, window_bounds = array<i64: 8, 128>}, {transform_indices = @transform_2, window_bounds = array<i64: 8, 128>}, {transform_indices = @transform_3, window_bounds = array<i64: 8, 4>}, {pipeline_mode = #tpu.pipeline_mode<synchronous>, transform_indices = @transform_4, window_bounds = array<i64: 4, 128>}, {pipeline_mode = #tpu.pipeline_mode<synchronous>, transform_indices = @transform_5, window_bounds = array<i64: 1, 128>}, {pipeline_mode = #tpu.pipeline_mode<synchronous>, transform_indices = @transform_6, window_bounds = array<i64: 1, 128>}, {pipeline_mode = #tpu.pipeline_mode<synchronous>, transform_indices = @transform_7, window_bounds = array<i64: 1, 128>}, {pipeline_mode = #tpu.pipeline_mode<synchronous>, transform_indices = @transform_8, window_bounds = array<i64: 1, 128>}, {pipeline_mode = #tpu.pipeline_mode<synchronous>, transform_indices = @transform_9, window_bounds = array<i64: 1, 128>}, {transform_indices = @transform_10, window_bounds = array<i64: 8, 128>}, {transform_indices = @transform_11, window_bounds = array<i64: 8, 128>}, {transform_indices = @transform_12, window_bounds = array<i64: 8, 128>}, {transform_indices = @transform_13, window_bounds = array<i64: 8, 128>}]} {
    %c0 = arith.constant 0 : index
    %c0_0 = arith.constant 0 : index
    %0 = vector.load %arg1[%c0, %c0_0] : memref<8x128xf32, #tpu.memory_space<vmem>>, vector<8x128xf32>
    %c0_1 = arith.constant 0 : index
    %c0_2 = arith.constant 0 : index
    %1 = vector.load %arg2[%c0_1, %c0_2] : memref<8x128xf32, #tpu.memory_space<vmem>>, vector<8x128xf32>
    %c0_3 = arith.constant 0 : index
    %c0_4 = arith.constant 0 : index
    %2 = vector.load %arg3[%c0_3, %c0_4] : memref<8x128xf32, #tpu.memory_space<vmem>>, vector<8x128xf32>
    %c0_5 = arith.constant 0 : index
    %c0_6 = arith.constant 0 : index
    %3 = vector.load %arg6[%c0_5, %c0_6] : memref<1x128xf32, #tpu.memory_space<vmem>>, vector<1x128xf32>
    %4 = arith.negf %3 : vector<1x128xf32>
    %5 = math.exp %4 : vector<1x128xf32>
    %cst = arith.constant 1.000000e+00 : f32
    %6 = vector.broadcast %cst : f32 to vector<1x128xf32>
    %7 = arith.addf %6, %5 : vector<1x128xf32>
    %8 = arith.divf %6, %7 : vector<1x128xf32>
    %c0_7 = arith.constant 0 : index
    %c0_8 = arith.constant 0 : index
    %9 = vector.load %arg7[%c0_7, %c0_8] : memref<1x128xf32, #tpu.memory_space<vmem>>, vector<1x128xf32>
    %10 = arith.negf %9 : vector<1x128xf32>
    %11 = math.exp %10 : vector<1x128xf32>
    %cst_9 = arith.constant 1.000000e+00 : f32
    %12 = vector.broadcast %cst_9 : f32 to vector<1x128xf32>
    %13 = arith.addf %12, %11 : vector<1x128xf32>
    %14 = arith.divf %12, %13 : vector<1x128xf32>
    %c0_10 = arith.constant 0 : index
    %c0_11 = arith.constant 0 : index
    %15 = vector.load %arg8[%c0_10, %c0_11] : memref<1x128xf32, #tpu.memory_space<vmem>>, vector<1x128xf32>
    %16 = arith.negf %15 : vector<1x128xf32>
    %17 = math.exp %16 : vector<1x128xf32>
    %cst_12 = arith.constant 1.000000e+00 : f32
    %18 = vector.broadcast %cst_12 : f32 to vector<1x128xf32>
    %19 = arith.addf %18, %17 : vector<1x128xf32>
    %20 = arith.divf %18, %19 : vector<1x128xf32>
    %c0_13 = arith.constant 0 : index
    %c0_14 = arith.constant 0 : index
    %21 = vector.load %arg9[%c0_13, %c0_14] : memref<1x128xf32, #tpu.memory_space<vmem>>, vector<1x128xf32>
    %22 = arith.negf %21 : vector<1x128xf32>
    %23 = math.exp %22 : vector<1x128xf32>
    %cst_15 = arith.constant 1.000000e+00 : f32
    %24 = vector.broadcast %cst_15 : f32 to vector<1x128xf32>
    %25 = arith.addf %24, %23 : vector<1x128xf32>
    %26 = arith.divf %24, %25 : vector<1x128xf32>
    %c0_16 = arith.constant 0 : index
    %c0_17 = arith.constant 0 : index
    %27 = vector.load %arg10[%c0_16, %c0_17] : memref<1x128xf32, #tpu.memory_space<vmem>>, vector<1x128xf32>
    %28 = math.exp %27 : vector<1x128xf32>
    %c0_18 = arith.constant 0 : index
    %c0_19 = arith.constant 0 : index
    %29 = vector.load %arg4[%c0_18, %c0_19] : memref<8x4xf32, #tpu.memory_space<vmem>>, vector<8x4xf32>
    %c0_20 = arith.constant 0 : index
    %c0_21 = arith.constant 0 : index
    %30 = vector.load %arg5[%c0_20, %c0_21] : memref<4x128xf32, #tpu.memory_space<vmem>>, vector<4x128xf32>
    %31 = vector.extract_strided_slice %29 {offsets = [0, 0], sizes = [8, 1], strides = [1, 1]} : vector<8x4xf32> to vector<8x1xf32>
    %32 = vector.extract_strided_slice %30 {offsets = [0, 0], sizes = [1, 128], strides = [1, 1]} : vector<4x128xf32> to vector<1x128xf32>
    %33 = vector.broadcast %31 : vector<8x1xf32> to vector<8x128xf32>
    %34 = vector.broadcast %32 : vector<1x128xf32> to vector<8x128xf32>
    %35 = arith.mulf %33, %34 : vector<8x128xf32>
    %36 = vector.extract_strided_slice %29 {offsets = [0, 1], sizes = [8, 1], strides = [1, 1]} : vector<8x4xf32> to vector<8x1xf32>
    %37 = vector.extract_strided_slice %30 {offsets = [1, 0], sizes = [1, 128], strides = [1, 1]} : vector<4x128xf32> to vector<1x128xf32>
    %38 = vector.broadcast %36 : vector<8x1xf32> to vector<8x128xf32>
    %39 = vector.broadcast %37 : vector<1x128xf32> to vector<8x128xf32>
    %40 = arith.mulf %38, %39 : vector<8x128xf32>
    %41 = arith.addf %35, %40 : vector<8x128xf32>
    %42 = vector.extract_strided_slice %29 {offsets = [0, 2], sizes = [8, 1], strides = [1, 1]} : vector<8x4xf32> to vector<8x1xf32>
    %43 = vector.extract_strided_slice %30 {offsets = [2, 0], sizes = [1, 128], strides = [1, 1]} : vector<4x128xf32> to vector<1x128xf32>
    %44 = vector.broadcast %42 : vector<8x1xf32> to vector<8x128xf32>
    %45 = vector.broadcast %43 : vector<1x128xf32> to vector<8x128xf32>
    %46 = arith.mulf %44, %45 : vector<8x128xf32>
    %47 = arith.addf %41, %46 : vector<8x128xf32>
    %48 = vector.extract_strided_slice %29 {offsets = [0, 3], sizes = [8, 1], strides = [1, 1]} : vector<8x4xf32> to vector<8x1xf32>
    %49 = vector.extract_strided_slice %30 {offsets = [3, 0], sizes = [1, 128], strides = [1, 1]} : vector<4x128xf32> to vector<1x128xf32>
    %50 = vector.broadcast %48 : vector<8x1xf32> to vector<8x128xf32>
    %51 = vector.broadcast %49 : vector<1x128xf32> to vector<8x128xf32>
    %52 = arith.mulf %50, %51 : vector<8x128xf32>
    %53 = arith.addf %47, %52 : vector<8x128xf32>
    %54 = vector.broadcast %20 : vector<1x128xf32> to vector<8x128xf32>
    %55 = arith.mulf %53, %54 : vector<8x128xf32>
    %56 = vector.broadcast %26 : vector<1x128xf32> to vector<8x128xf32>
    %57 = arith.mulf %53, %56 : vector<8x128xf32>
    %58 = arith.addf %2, %0 : vector<8x128xf32>
    %59 = arith.addf %1, %58 : vector<8x128xf32>
    %60 = vector.broadcast %28 : vector<1x128xf32> to vector<8x128xf32>
    %61 = arith.subf %59, %60 : vector<8x128xf32>
    %cst_22 = arith.constant 0.000000e+00 : f32
    %62 = vector.broadcast %cst_22 : f32 to vector<8x128xf32>
    %63 = arith.maximumf %61, %62 : vector<8x128xf32>
    %64 = vector.broadcast %8 : vector<1x128xf32> to vector<8x128xf32>
    %65 = arith.mulf %63, %64 : vector<8x128xf32>
    %66 = arith.addf %63, %58 : vector<8x128xf32>
    %67 = vector.broadcast %28 : vector<1x128xf32> to vector<8x128xf32>
    %68 = arith.minimumf %66, %67 : vector<8x128xf32>
    %69 = vector.broadcast %14 : vector<1x128xf32> to vector<8x128xf32>
    %70 = arith.mulf %68, %69 : vector<8x128xf32>
    %c0_23 = arith.constant 0 : index
    %c0_24 = arith.constant 0 : index
    %71 = vector.load %arg11[%c0_23, %c0_24] : memref<8x128xf32, #tpu.memory_space<vmem>>, vector<8x128xf32>
    tpu.vector_store %arg11[%c0_23, %c0_24], %65 {strides = array<i32>} : memref<8x128xf32, #tpu.memory_space<vmem>>, vector<8x128xf32>,
    %c0_25 = arith.constant 0 : index
    %c0_26 = arith.constant 0 : index
    %72 = vector.load %arg12[%c0_25, %c0_26] : memref<8x128xf32, #tpu.memory_space<vmem>>, vector<8x128xf32>
    tpu.vector_store %arg12[%c0_25, %c0_26], %70 {strides = array<i32>} : memref<8x128xf32, #tpu.memory_space<vmem>>, vector<8x128xf32>,
    %73 = arith.subf %63, %65 : vector<8x128xf32>
    %74 = arith.subf %73, %55 : vector<8x128xf32>
    %cst_27 = arith.constant 0.000000e+00 : f32
    %75 = vector.broadcast %cst_27 : f32 to vector<8x128xf32>
    %76 = arith.maximumf %74, %75 : vector<8x128xf32>
    %c0_28 = arith.constant 0 : index
    %c0_29 = arith.constant 0 : index
    %77 = vector.load %arg13[%c0_28, %c0_29] : memref<8x128xf32, #tpu.memory_space<vmem>>, vector<8x128xf32>
    tpu.vector_store %arg13[%c0_28, %c0_29], %76 {strides = array<i32>} : memref<8x128xf32, #tpu.memory_space<vmem>>, vector<8x128xf32>,
    %78 = arith.subf %68, %70 : vector<8x128xf32>
    %79 = arith.subf %78, %57 : vector<8x128xf32>
    %80 = arith.subf %79, %70 : vector<8x128xf32>
    %cst_30 = arith.constant 0.000000e+00 : f32
    %81 = vector.broadcast %cst_30 : f32 to vector<8x128xf32>
    %82 = arith.maximumf %80, %81 : vector<8x128xf32>
    %c0_31 = arith.constant 0 : index
    %c0_32 = arith.constant 0 : index
    %83 = vector.load %arg14[%c0_31, %c0_32] : memref<8x128xf32, #tpu.memory_space<vmem>>, vector<8x128xf32>
    tpu.vector_store %arg14[%c0_31, %c0_32], %82 {strides = array<i32>} : memref<8x128xf32, #tpu.memory_space<vmem>>, vector<8x128xf32>,
    return
  }
  func.func @transform_0(%arg0: i32) -> (i32, i32) {
    %c0_i32 = arith.constant 0 : i32
    %c0_i32_0 = arith.constant 0 : i32
    return %arg0, %c0_i32 : i32, i32
  }
  func.func @transform_1(%arg0: i32) -> (i32, i32) {
    %c0_i32 = arith.constant 0 : i32
    %c0_i32_0 = arith.constant 0 : i32
    return %arg0, %c0_i32 : i32, i32
  }
  func.func @transform_2(%arg0: i32) -> (i32, i32) {
    %c0_i32 = arith.constant 0 : i32
    %c0_i32_0 = arith.constant 0 : i32
    return %arg0, %c0_i32 : i32, i32
  }
  func.func @transform_3(%arg0: i32) -> (i32, i32) {
    %c0_i32 = arith.constant 0 : i32
    %c0_i32_0 = arith.constant 0 : i32
    return %arg0, %c0_i32 : i32, i32
  }
  func.func @transform_4(%arg0: i32) -> (i32, i32) {
    %c0_i32 = arith.constant 0 : i32
    %c0_i32_0 = arith.constant 0 : i32
    %c0_i32_1 = arith.constant 0 : i32
    return %c0_i32, %c0_i32_0 : i32, i32
  }
  func.func @transform_5(%arg0: i32) -> (i32, i32) {
    %c0_i32 = arith.constant 0 : i32
    %c0_i32_0 = arith.constant 0 : i32
    %c0_i32_1 = arith.constant 0 : i32
    return %c0_i32, %c0_i32_0 : i32, i32
  }
  func.func @transform_6(%arg0: i32) -> (i32, i32) {
    %c0_i32 = arith.constant 0 : i32
    %c0_i32_0 = arith.constant 0 : i32
    %c0_i32_1 = arith.constant 0 : i32
    return %c0_i32, %c0_i32_0 : i32, i32
  }
  func.func @transform_7(%arg0: i32) -> (i32, i32) {
    %c0_i32 = arith.constant 0 : i32
    %c0_i32_0 = arith.constant 0 : i32
    %c0_i32_1 = arith.constant 0 : i32
    return %c0_i32, %c0_i32_0 : i32, i32
  }
  func.func @transform_8(%arg0: i32) -> (i32, i32) {
    %c0_i32 = arith.constant 0 : i32
    %c0_i32_0 = arith.constant 0 : i32
    %c0_i32_1 = arith.constant 0 : i32
    return %c0_i32, %c0_i32_0 : i32, i32
  }
  func.func @transform_9(%arg0: i32) -> (i32, i32) {
    %c0_i32 = arith.constant 0 : i32
    %c0_i32_0 = arith.constant 0 : i32
    %c0_i32_1 = arith.constant 0 : i32
    return %c0_i32, %c0_i32_0 : i32, i32
  }
  func.func @transform_10(%arg0: i32) -> (i32, i32) {
    %c0_i32 = arith.constant 0 : i32
    %c0_i32_0 = arith.constant 0 : i32
    return %arg0, %c0_i32 : i32, i32
  }
  func.func @transform_11(%arg0: i32) -> (i32, i32) {
    %c0_i32 = arith.constant 0 : i32
    %c0_i32_0 = arith.constant 0 : i32
    return %arg0, %c0_i32 : i32, i32
  }
  func.func @transform_12(%arg0: i32) -> (i32, i32) {
    %c0_i32 = arith.constant 0 : i32
    %c0_i32_0 = arith.constant 0 : i32
    return %arg0, %c0_i32 : i32, i32
  }
  func.func @transform_13(%arg0: i32) -> (i32, i32) {
    %c0_i32 = arith.constant 0 : i32
    %c0_i32_0 = arith.constant 0 : i32
    return %arg0, %c0_i32 : i32, i32
  }
}

</mosaic_0001>

<llo_original>
// kernel: tpu_custom_call.1
$region0: #{tpu_custom_call.1}
  #allocation0 [shape = 'u32[]', space=smem, size = 0x4, offset = 0x4, fixed_abs, tag = 'smem constant byte address 0x4 - core index']
  #allocation1 [shape = 'u32[144,128]{1,0:T(1,128)}', space=vmem, size = 0x12000, scoped, tag = 'internal scratch']
  %s0 = inlined_call_operand.vmem [shape: f32[8,128], index: 0, kind: input, shape index: {}]
  %s1 = inlined_call_operand.hbm [shape: f32[8,128], index: 1, kind: input, shape index: {}]
  %s2 = inlined_call_operand.hbm [shape: f32[8,128], index: 2, kind: input, shape index: {}]
  %s3 = inlined_call_operand.vmem [shape: f32[8,4], index: 3, kind: input, shape index: {}]
  %s4 = inlined_call_operand.vmem [shape: f32[4,128], index: 4, kind: input, shape index: {}]
  %s5 = inlined_call_operand.vmem [shape: f32[1,128], index: 5, kind: input, shape index: {}]
  %s6 = inlined_call_operand.vmem [shape: f32[1,128], index: 6, kind: input, shape index: {}]
  %s7 = inlined_call_operand.vmem [shape: f32[1,128], index: 7, kind: input, shape index: {}]
  %s8 = inlined_call_operand.vmem [shape: f32[1,128], index: 8, kind: input, shape index: {}]
  %s9 = inlined_call_operand.vmem [shape: f32[1,128], index: 9, kind: input, shape index: {}]
  %s10 = inlined_call_operand.hbm [shape: f32[8,128], index: 10, kind: output, shape index: {0}]
  %s11 = inlined_call_operand.hbm [shape: f32[8,128], index: 11, kind: output, shape index: {1}]
  %s12 = inlined_call_operand.hbm [shape: f32[8,128], index: 12, kind: output, shape index: {2}]
  %s13 = inlined_call_operand.hbm [shape: f32[8,128], index: 13, kind: output, shape index: {3}]
  %14 = xla_tuple %s10, %s11, %s12, %s13
  %s15 = sld [smem:[#allocation0]]
  $region82: #{tpu_custom_call.1} parent=0
    _
  %s17 = ssub.s32 1, %s15
  %s18 = scalar_select 0, %s17, %s15
  $region1: #{tpu_custom_call.1} parent=0
    #allocation2 [shape = 'u8[4096]{0}', space=vmem, size = 0x1000, scoped, tag = 'input window, operand 1, single buffered']
    #allocation3 [shape = 's32[1]{0}', space=sflag, size = 0x4, scoped, tag = 'scoped memory for tpu_custom_call.1']
    #allocation4 [shape = 's32[1]{0}', space=sflag, size = 0x4, scoped, tag = 'scoped memory for tpu_custom_call.1']
    #allocation5 [shape = 'u8[4096]{0}', space=vmem, size = 0x1000, scoped, tag = 'input window, operand 2, single buffered']
    #allocation6 [shape = 's32[1]{0}', space=sflag, size = 0x4, scoped, tag = 'scoped memory for tpu_custom_call.1']
    #allocation7 [shape = 'u8[4096]{0}', space=vmem, size = 0x1000, scoped, tag = 'output window, operand 0, single buffered']
    #allocation8 [shape = 'u8[4096]{0}', space=vmem, size = 0x1000, scoped, tag = 'output window, operand 1, single buffered']
    #allocation9 [shape = 's32[1]{0}', space=sflag, size = 0x4, scoped, tag = 'scoped memory for tpu_custom_call.1']
    #allocation10 [shape = 'u8[4096]{0}', space=vmem, size = 0x1000, scoped, tag = 'output window, operand 2, single buffered']
    #allocation11 [shape = 'u8[4096]{0}', space=vmem, size = 0x1000, scoped, tag = 'output window, operand 3, single buffered']
    #allocation12 [shape = 's32[1]{0}', space=sflag, size = 0x4, scoped, tag = 'scoped memory for tpu_custom_call.1']
    %19 = vsyncpa [#allocation3], 0
    %20 = vsyncpa [#allocation6], 0
    %21 = vsyncpa [#allocation4], 0
    %22 = vsyncpa [#allocation9], 0
    %23 = vsyncpa [#allocation12], 0
    // Predicated region
    $region2: #{tpu_custom_call.1} parent=1 // pred_check
      _
    $region3: #{tpu_custom_call.1} parent=1 // pred_check_branch
      %25 = sbr.rel (0) target = $region5
    $region4: #{tpu_custom_call.1} parent=1 // pred_region
      _
    $region5: #{tpu_custom_call.1} parent=1 // pred_fallthru
      _
    // Predicated region
    $region6: #{tpu_custom_call.1} parent=1 // pred_check
      _
    $region7: #{tpu_custom_call.1} parent=1 // pred_check_branch
      %27 = sbr.rel (0) target = $region9
    $region8: #{tpu_custom_call.1} parent=1 // pred_region
      %s29 = ssub.s32 128, 128
      %30 = vsyncadd [#allocation3], %s29
      %s32 = sshll.u32 [#allocation2], 4
      %s33 = int_to_ptr.vmem [resolvable:$true] %s32
      %35 = dma.hbm_to_vmem [thread:$0]  %s1, 128, %s33, [#allocation3]
    $region9: #{tpu_custom_call.1} parent=1 // pred_fallthru
      _
    // Predicated region
    $region10: #{tpu_custom_call.1} parent=1 // pred_check
      _
    $region11: #{tpu_custom_call.1} parent=1 // pred_check_branch
      %37 = sbr.rel (0) target = $region13
    $region12: #{tpu_custom_call.1} parent=1 // pred_region
      %s39 = ssub.s32 128, 128
      %40 = vsyncadd [#allocation6], %s39
      %s42 = sshll.u32 [#allocation5], 4
      %s43 = int_to_ptr.vmem [resolvable:$true] %s42
      %45 = dma.hbm_to_vmem [thread:$0]  %s2, 128, %s43, [#allocation6]
    $region13: #{tpu_custom_call.1} parent=1 // pred_fallthru
      _
    // Predicated region
    $region14: #{tpu_custom_call.1} parent=1 // pred_check
      _
    $region15: #{tpu_custom_call.1} parent=1 // pred_check_branch
      %47 = sbr.rel (0) target = $region17
    $region16: #{tpu_custom_call.1} parent=1 // pred_region
      _
    $region17: #{tpu_custom_call.1} parent=1 // pred_fallthru
      _
    // Predicated region
    $region18: #{tpu_custom_call.1} parent=1 // pred_check
      _
    $region19: #{tpu_custom_call.1} parent=1 // pred_check_branch
      %49 = sbr.rel (0) target = $region21
    $region20: #{tpu_custom_call.1} parent=1 // pred_region
      _
    $region21: #{tpu_custom_call.1} parent=1 // pred_fallthru
      _
    // Predicated region
    $region22: #{tpu_custom_call.1} parent=1 // pred_check
      _
    $region23: #{tpu_custom_call.1} parent=1 // pred_check_branch
      %51 = sbr.rel (0) target = $region25
    $region24: #{tpu_custom_call.1} parent=1 // pred_region
      _
    $region25: #{tpu_custom_call.1} parent=1 // pred_fallthru
      _
    // Predicated region
    $region26: #{tpu_custom_call.1} parent=1 // pred_check
      _
    $region27: #{tpu_custom_call.1} parent=1 // pred_check_branch
      %53 = sbr.rel (0) target = $region29
    $region28: #{tpu_custom_call.1} parent=1 // pred_region
      _
    $region29: #{tpu_custom_call.1} parent=1 // pred_fallthru
      _
    // Predicated region
    $region30: #{tpu_custom_call.1} parent=1 // pred_check
      _
    $region31: #{tpu_custom_call.1} parent=1 // pred_check_branch
      %55 = sbr.rel (0) target = $region33
    $region32: #{tpu_custom_call.1} parent=1 // pred_region
      _
    $region33: #{tpu_custom_call.1} parent=1 // pred_fallthru
      _
    // Predicated region
    $region34: #{tpu_custom_call.1} parent=1 // pred_check
      _
    $region35: #{tpu_custom_call.1} parent=1 // pred_check_branch
      %57 = sbr.rel (0) target = $region37
    $region36: #{tpu_custom_call.1} parent=1 // pred_region
      _
    $region37: #{tpu_custom_call.1} parent=1 // pred_fallthru
      _
    // Predicated region
    $region38: #{tpu_custom_call.1} parent=1 // pred_check
      _
    $region39: #{tpu_custom_call.1} parent=1 // pred_check_branch
      %59 = sbr.rel (0) target = $region41
    $region40: #{tpu_custom_call.1} parent=1 // pred_region
      _
    $region41: #{tpu_custom_call.1} parent=1 // pred_fallthru
      _
    // Predicated region
    $region42: #{tpu_custom_call.1} parent=1 // pred_check
      _
    $region43: #{tpu_custom_call.1} parent=1 // pred_check_branch
      %61 = sbr.rel (0) target = $region45
    $region44: #{tpu_custom_call.1} parent=1 // pred_region
      %62 = dma.done [#allocation3], 128
    $region45: #{tpu_custom_call.1} parent=1 // pred_fallthru
      _
    // Predicated region
    $region46: #{tpu_custom_call.1} parent=1 // pred_check
      _
    $region47: #{tpu_custom_call.1} parent=1 // pred_check_branch
      %64 = sbr.rel (0) target = $region49
    $region48: #{tpu_custom_call.1} parent=1 // pred_region
      %65 = dma.done [#allocation6], 128
    $region49: #{tpu_custom_call.1} parent=1 // pred_fallthru
      _
    %v66 = vld [vmem:[%s0] sm:$0xff]
    %v67 = vld [vmem:[#allocation2] sm:$0xff]
    %v68 = vld [vmem:[#allocation5] sm:$0xff]
    %v69 = vld [vmem:[%s5] sm:$0x1]
    %v70 = vxor.u32 %v69, 2147483648
    %v71 = vmul.f32 %v70, 1.442695
    %v72 = vpow.pop %v71
    %v73 = vadd.f32 %v72, 1.0
    %v74 = vrcp.pop %v73
    %v75 = vmul.f32 1.0, %v74
    %v76 = vld [vmem:[%s6] sm:$0x1]
    %v77 = vxor.u32 %v76, 2147483648
    %v78 = vmul.f32 %v77, 1.442695
    %v79 = vpow.pop %v78
    %v80 = vadd.f32 %v79, 1.0
    %v81 = vrcp.pop %v80
    %v82 = vmul.f32 1.0, %v81
    %v83 = vld [vmem:[%s7] sm:$0x1]
    %v84 = vxor.u32 %v83, 2147483648
    %v85 = vmul.f32 %v84, 1.442695
    %v86 = vpow.pop %v85
    %v87 = vadd.f32 %v86, 1.0
    %v88 = vrcp.pop %v87
    %v89 = vmul.f32 1.0, %v88
    %v90 = vld [vmem:[%s8] sm:$0x1]
    %v91 = vxor.u32 %v90, 2147483648
    %v92 = vmul.f32 %v91, 1.442695
    %v93 = vpow.pop %v92
    %v94 = vadd.f32 %v93, 1.0
    %v95 = vrcp.pop %v94
    %v96 = vmul.f32 1.0, %v95
    %v97 = vld [vmem:[%s9] sm:$0x1]
    %v98 = vmul.f32 %v97, 1.442695
    %v99 = vpow.pop %v98
    %v100 = vld [vmem:[%s3] sm:$0xff]
    %v101 = vld [vmem:[%s4] sm:$0xf]
    %103 = vset.pattern.permute.xlu0 0
    %104 = vperm.xlu0 %103, %v100
    %v105 = vpop.permute.xlu0 %104
    %v107 = vlaneseq
    %v108 = vshrl.u32 %v107, 7
    %v109 = vsub.s32 0, %v108
    %v110 = vrot.slane %v101, %v109
    %v111 = vmul.f32 %v105, %v110
    %112 = vset.pattern.permute.xlu0 1
    %113 = vperm.xlu0 %112, %v100
    %v114 = vpop.permute.xlu0 %113
    %v116 = vlaneseq
    %v117 = vshrl.u32 %v116, 7
    %v118 = vsub.s32 1, %v117
    %v119 = vrot.slane %v101, %v118
    %v120 = vmul.f32 %v114, %v119
    %v121 = vadd.f32 %v111, %v120
    %122 = vset.pattern.permute.xlu0 2
    %123 = vperm.xlu0 %122, %v100
    %v124 = vpop.permute.xlu0 %123
    %v126 = vlaneseq
    %v127 = vshrl.u32 %v126, 7
    %v128 = vsub.s32 2, %v127
    %v129 = vrot.slane %v101, %v128
    %v130 = vmul.f32 %v124, %v129
    %v131 = vadd.f32 %v121, %v130
    %132 = vset.pattern.permute.xlu0 3
    %133 = vperm.xlu0 %132, %v100
    %v134 = vpop.permute.xlu0 %133
    %v136 = vlaneseq
    %v137 = vshrl.u32 %v136, 7
    %v138 = vsub.s32 3, %v137
    %v139 = vrot.slane %v101, %v138
    %v140 = vmul.f32 %v134, %v139
    %v141 = vadd.f32 %v131, %v140
    %v143 = vlaneseq
    %v144 = vshrl.u32 %v143, 7
    %v145 = vsub.s32 0, %v144
    %v146 = vrot.slane %v89, %v145
    %v148 = vmul.f32 %v141, %v146
    %v150 = vlaneseq
    %v151 = vshrl.u32 %v150, 7
    %v152 = vsub.s32 0, %v151
    %v153 = vrot.slane %v96, %v152
    %v155 = vmul.f32 %v141, %v153
    %v156 = vadd.f32 %v68, %v66
    %v157 = vadd.f32 %v67, %v156
    %v159 = vlaneseq
    %v160 = vshrl.u32 %v159, 7
    %v161 = vsub.s32 0, %v160
    %v162 = vrot.slane %v99, %v161
    %v164 = vsub.f32 %v157, %v162
    %v165 = vmax.f32 %v164, 0.0
    %v167 = vlaneseq
    %v168 = vshrl.u32 %v167, 7
    %v169 = vsub.s32 0, %v168
    %v170 = vrot.slane %v75, %v169
    %v172 = vmul.f32 %v165, %v170
    %v173 = vadd.f32 %v165, %v156
    %v174 = vmin.f32 %v173, %v162
    %v176 = vlaneseq
    %v177 = vshrl.u32 %v176, 7
    %v178 = vsub.s32 0, %v177
    %v179 = vrot.slane %v82, %v178
    %v181 = vmul.f32 %v174, %v179
    %182 = vst [vmem:[#allocation7] sm:$0xff] %v172
    %183 = vst [vmem:[#allocation8] sm:$0xff] %v181
    %v184 = vsub.f32 %v165, %v172
    %v185 = vsub.f32 %v184, %v148
    %v186 = vmax.f32 %v185, 0.0
    %187 = vst [vmem:[#allocation10] sm:$0xff] %v186
    %v188 = vsub.f32 %v174, %v181
    %v189 = vsub.f32 %v188, %v155
    %v190 = vsub.f32 %v189, %v181
    %v191 = vmax.f32 %v190, 0.0
    %192 = vst [vmem:[#allocation11] sm:$0xff] %v191
    // Predicated region
    $region50: #{tpu_custom_call.1} parent=1 // pred_check
      _
    $region51: #{tpu_custom_call.1} parent=1 // pred_check_branch
      %194 = sbr.rel (0) target = $region53
    $region52: #{tpu_custom_call.1} parent=1 // pred_region
      %s196 = ssub.s32 128, 128
      %197 = vsyncadd [#allocation4], %s196
      %s199 = sshll.u32 [#allocation7], 4
      %s200 = int_to_ptr.vmem [resolvable:$true] %s199
      %202 = dma.vmem_to_hbm [thread:$0]  %s200, 128, %s10, [#allocation4]
    $region53: #{tpu_custom_call.1} parent=1 // pred_fallthru
      _
    // Predicated region
    $region54: #{tpu_custom_call.1} parent=1 // pred_check
      _
    $region55: #{tpu_custom_call.1} parent=1 // pred_check_branch
      %204 = sbr.rel (0) target = $region57
    $region56: #{tpu_custom_call.1} parent=1 // pred_region
      %s206 = ssub.s32 128, 128
      %207 = vsyncadd [#allocation9], %s206
      %s209 = sshll.u32 [#allocation8], 4
      %s210 = int_to_ptr.vmem [resolvable:$true] %s209
      %212 = dma.vmem_to_hbm [thread:$0]  %s210, 128, %s11, [#allocation9]
    $region57: #{tpu_custom_call.1} parent=1 // pred_fallthru
      _
    // Predicated region
    $region58: #{tpu_custom_call.1} parent=1 // pred_check
      _
    $region59: #{tpu_custom_call.1} parent=1 // pred_check_branch
      %214 = sbr.rel (0) target = $region61
    $region60: #{tpu_custom_call.1} parent=1 // pred_region
      %s216 = ssub.s32 128, 128
      %217 = vsyncadd [#allocation9], %s216
      %s219 = sshll.u32 [#allocation10], 4
      %s220 = int_to_ptr.vmem [resolvable:$true] %s219
      %222 = dma.vmem_to_hbm [thread:$0]  %s220, 128, %s12, [#allocation9]
    $region61: #{tpu_custom_call.1} parent=1 // pred_fallthru
      _
    // Predicated region
    $region62: #{tpu_custom_call.1} parent=1 // pred_check
      _
    $region63: #{tpu_custom_call.1} parent=1 // pred_check_branch
      %224 = sbr.rel (0) target = $region65
    $region64: #{tpu_custom_call.1} parent=1 // pred_region
      %s226 = ssub.s32 128, 128
      %227 = vsyncadd [#allocation12], %s226
      %s229 = sshll.u32 [#allocation11], 4
      %s230 = int_to_ptr.vmem [resolvable:$true] %s229
      %232 = dma.vmem_to_hbm [thread:$0]  %s230, 128, %s13, [#allocation12]
    $region65: #{tpu_custom_call.1} parent=1 // pred_fallthru
      _
    // Predicated region
    $region66: #{tpu_custom_call.1} parent=1 // pred_check
      _
    $region67: #{tpu_custom_call.1} parent=1 // pred_check_branch
      %234 = sbr.rel (0) target = $region69
    $region68: #{tpu_custom_call.1} parent=1 // pred_region
      %235 = dma.done [#allocation4], 128
    $region69: #{tpu_custom_call.1} parent=1 // pred_fallthru
      _
    // Predicated region
    $region70: #{tpu_custom_call.1} parent=1 // pred_check
      _
    $region71: #{tpu_custom_call.1} parent=1 // pred_check_branch
      %237 = sbr.rel (0) target = $region73
    $region72: #{tpu_custom_call.1} parent=1 // pred_region
      %238 = dma.done [#allocation9], 128
    $region73: #{tpu_custom_call.1} parent=1 // pred_fallthru
      _
    // Predicated region
    $region74: #{tpu_custom_call.1} parent=1 // pred_check
      _
    $region75: #{tpu_custom_call.1} parent=1 // pred_check_branch
      %240 = sbr.rel (0) target = $region77
    $region76: #{tpu_custom_call.1} parent=1 // pred_region
      %241 = dma.done [#allocation9], 128
    $region77: #{tpu_custom_call.1} parent=1 // pred_fallthru
      _
    // Predicated region
    $region78: #{tpu_custom_call.1} parent=1 // pred_check
      _
    $region79: #{tpu_custom_call.1} parent=1 // pred_check_branch
      %243 = sbr.rel (0) target = $region81
    $region80: #{tpu_custom_call.1} parent=1 // pred_region
      %244 = dma.done [#allocation12], 128
    $region81: #{tpu_custom_call.1} parent=1 // pred_fallthru
      _
    %245 = vsyncpa [#allocation3], 1
    %246 = vsyncpa [#allocation6], 1
    %247 = vsyncpa [#allocation4], 1
    %248 = vsyncpa [#allocation9], 1
    %249 = vsyncpa [#allocation12], 1

</llo_original>
